<compile_context>
chip_gen: v7x
topology: tpu7x:2x2x1
jax: 0.10.0
libtpu: 0.0.40
codegen_flags: <defaults>
</compile_context>

<pallas_src>
import functools

import jax
import jax.numpy as jnp
from jax.experimental import pallas as pl
from jax.experimental.pallas import tpu as pltpu


def _round_up(x: int, m: int) -> int:
    return (x + m - 1) // m * m


def _cdiv(a: int, b: int) -> int:
    return (a + b - 1) // b


def _vmem_capacity_bytes() -> int:
    """Physical VMEM per TensorCore; fall back to the tightest (v7x) figure."""
    try:
        info = pltpu.get_tpu_info()
        cap = getattr(info, "vmem_capacity_bytes", None)
        if cap:
            return int(cap)
    except Exception:
        pass
    return 64 * 1024 * 1024


_GELU_C = 0.7978845608028654  # sqrt(2 / pi)


def _layernorm_gelu(y, gamma, beta, *, eps, valid_cols):
    """LayerNorm + GELU(tanh) on an f32 tile whose padded columns are exactly 0."""
    inv_n = 1.0 / float(valid_cols)
    # One-pass statistics over the *real* out_dim: padded columns contribute 0
    # to both sums, so only the divisor accounts for padding.
    sum_y = jnp.sum(y, axis=-1, keepdims=True)
    sum_y2 = jnp.sum(y * y, axis=-1, keepdims=True)
    mean = sum_y * inv_n
    var = jnp.maximum(sum_y2 * inv_n - mean * mean, 0.0)
    inv = jax.lax.rsqrt(var + eps)
    yn = (y - mean) * inv * gamma + beta          # padded gamma/beta are 0 -> yn stays 0
    # GELU, tanh approximation (matches nn.GELU(approximate='tanh')).
    inner = _GELU_C * (yn + 0.044715 * yn * yn * yn)
    return 0.5 * yn * (1.0 + jnp.tanh(inner))


def _fused_kernel(x_ref, w_ref, p_ref, o_ref, *, eps, valid_cols, mm_dtype):
    # x_ref: (tile_rows, K)      original dtype (cast to mm_dtype here, not in the wrapper)
    # w_ref: (K, M_pad)          mm_dtype, VMEM-resident (Buffered(1))
    # p_ref: (3, M_pad) f32      rows = [bias, gamma, beta], padded cols are 0
    # o_ref: (tile_rows, M_pad)
    x = x_ref[...].astype(mm_dtype)
    y = jnp.dot(x, w_ref[...], preferred_element_type=jnp.float32)
    p = p_ref[...]
    y = y + p[0:1, :]
    g = _layernorm_gelu(y, p[1:2, :], p[2:3, :], eps=eps, valid_cols=valid_cols)
    o_ref[...] = g.astype(o_ref.dtype)


def _ktiled_kernel(x_ref, w_ref, p_ref, o_ref, acc_ref, *, eps, valid_cols, mm_dtype):
    # Streamed-weight path: grid = (row_tiles, K/tile_k), reduction axis last.
    k = pl.program_id(1)

    @pl.when(k == 0)
    def _():
        acc_ref[...] = jnp.zeros_like(acc_ref)

    x = x_ref[...].astype(mm_dtype)
    acc_ref[...] += jnp.dot(x, w_ref[...], preferred_element_type=jnp.float32)

    @pl.when(k == pl.num_programs(1) - 1)
    def _():
        p = p_ref[...]
        y = acc_ref[...] + p[0:1, :]
        g = _layernorm_gelu(y, p[1:2, :], p[2:3, :], eps=eps, valid_cols=valid_cols)
        o_ref[...] = g.astype(o_ref.dtype)


def prepare_shared_mlp_params(w, b, gamma, beta, *, use_bf16=True, tile_k=512,
                              force_ktiled=False, vmem_budget=None):
    """One-time parameter prep (pad + cast).  Reuse the result across calls."""
    in_dim, out_dim = w.shape
    m_pad = _round_up(out_dim, 128)
    mm_dtype = jnp.bfloat16 if use_bf16 else jnp.float32
    w_itemsize = jnp.dtype(mm_dtype).itemsize

    if vmem_budget is None:
        vmem_budget = int(0.70 * _vmem_capacity_bytes())

    # Keep the whole weight VMEM-resident when it uses <= ~half the budget;
    # otherwise stream (tile_k, m_pad) slabs and accumulate over K.
    resident_w_bytes = in_dim * m_pad * w_itemsize
    ktiled = bool(force_ktiled) or resident_w_bytes > vmem_budget // 2

    # Fused (bias, gamma, beta) parameter block; padded columns stay 0 so the
    # padded output columns are exactly 0 and LN stats stay exact.
    params = jnp.zeros((3, m_pad), jnp.float32)
    params = params.at[0, :out_dim].set(b.astype(jnp.float32))
    params = params.at[1, :out_dim].set(gamma.astype(jnp.float32))
    params = params.at[2, :out_dim].set(beta.astype(jnp.float32))

    if ktiled:
        k_pad = _round_up(in_dim, 128)
        tile_k = max(128, min(_round_up(tile_k, 128), k_pad))
        while k_pad % tile_k:          # tile_k must divide the padded K
            tile_k -= 128
        w_p = jnp.zeros((k_pad, m_pad), mm_dtype).at[:in_dim, :out_dim].set(
            w.astype(mm_dtype))
    else:
        k_pad = in_dim                 # kernel block covers the full K (no x feature padding)
        tile_k = in_dim
        if out_dim == m_pad and w.dtype == jnp.dtype(mm_dtype):
            w_p = w                    # already aligned & right dtype: no copy at all
        else:
            w_p = jnp.zeros((in_dim, m_pad), mm_dtype).at[:, :out_dim].set(
                w.astype(mm_dtype))

    return dict(w=w_p, params=params, in_dim=in_dim, out_dim=out_dim,
                m_pad=m_pad, k_pad=k_pad, tile_k=tile_k,
                mm_dtype=mm_dtype, ktiled=ktiled)


def shared_mlp_apply(x, prep, *, eps=1e-5, tile_rows=512, out_dtype=None,
                     vmem_budget=None):
    """x: (..., in_dim) -> (..., out_dim). Fused Linear + LayerNorm + GELU(tanh)."""
    in_dim, out_dim = prep["in_dim"], prep["out_dim"]
    m_pad, k_pad, tile_k = prep["m_pad"], prep["k_pad"], prep["tile_k"]
    mm_dtype, ktiled = prep["mm_dtype"], prep["ktiled"]
    w_p, params = prep["w"], prep["params"]

    lead = x.shape[:-1]
    x2 = x.reshape(-1, in_dim)
    n_rows = x2.shape[0]
    out_dtype = out_dtype if out_dtype is not None else x.dtype

    capacity = _vmem_capacity_bytes()
    if vmem_budget is None:
        vmem_budget = int(0.70 * capacity)

    x_itemsize = jnp.dtype(x.dtype).itemsize
    o_itemsize = jnp.dtype(out_dtype).itemsize
    w_itemsize = jnp.dtype(mm_dtype).itemsize
    p_bytes = 3 * m_pad * 4

    # --- Row tile sizing --------------------------------------------------
    tile_rows = max(8, _round_up(min(tile_rows, _round_up(n_rows, 8)), 8))
    # v7x megacore: make sure the parallel row axis has >= 2 steps so both
    # TensorCores get work (no effect on single-TC v5e/v6e).
    if _cdiv(n_rows, tile_rows) < 2 and n_rows > 8:
        tile_rows = _round_up(_cdiv(n_rows, 2), 8)

    def _vmem_use(tr):
        if ktiled:
            return (2 * tr * tile_k * x_itemsize        # streamed x tiles (double-buffered)
                    + 2 * tile_k * m_pad * w_itemsize   # streamed weight slabs
                    + 2 * tr * m_pad * o_itemsize       # output tiles
                    + tr * m_pad * 4                    # f32 accumulator scratch
                    + p_bytes)
        return (2 * tr * k_pad * x_itemsize             # streamed x tiles
                + 2 * tr * m_pad * o_itemsize           # output tiles
                + k_pad * m_pad * w_itemsize            # resident weight (Buffered(1))
                + p_bytes)

    while tile_rows > 8 and _vmem_use(tile_rows) > vmem_budget:
        tile_rows = max(8, _round_up(tile_rows // 2, 8))

    n_rows_p = _round_up(n_rows, tile_rows)
    num_row_tiles = n_rows_p // tile_rows

    # Pad only the remainder (rows; plus K columns on the K-tiled path).
    pad_rows = n_rows_p - n_rows
    pad_k = k_pad - in_dim
    if pad_rows or pad_k:
        x2 = jnp.pad(x2, ((0, pad_rows), (0, pad_k)))

    cost = pl.CostEstimate(
        flops=2 * n_rows_p * k_pad * m_pad,
        transcendentals=n_rows_p * m_pad,                # one tanh per output element
        bytes_accessed=(n_rows_p * k_pad * x_itemsize
                        + (num_row_tiles if ktiled else 1) * k_pad * m_pad * w_itemsize
                        + p_bytes
                        + n_rows_p * m_pad * o_itemsize))

    # Raise the scoped-VMEM limit (16 MiB on v5e / 32 MiB on v6e & v7x by
    # default) so the large tiles picked above are actually allowed.
    vmem_limit = min(int(0.9 * capacity), 100 * 1024 * 1024)

    if not ktiled:
        out = pl.pallas_call(
            functools.partial(_fused_kernel, eps=eps, valid_cols=out_dim,
                              mm_dtype=mm_dtype),
            out_shape=jax.ShapeDtypeStruct((n_rows_p, m_pad), out_dtype),
            grid_spec=pltpu.PrefetchScalarGridSpec(
                num_scalar_prefetch=0,
                grid=(num_row_tiles,),
                in_specs=[
                    # x row-tile: pipelined (double-buffered by default).
                    # If profiling shows exposed input DMA at very small K,
                    # bump to pipeline_mode=pl.Buffered(3).
                    pl.BlockSpec((tile_rows, k_pad), lambda i: (i, 0)),
                    # Weight: constant block index -> single-buffered resident copy.
                    pl.BlockSpec((k_pad, m_pad), lambda i: (0, 0),
                                 pipeline_mode=pl.Buffered(1)),
                    # Fused bias/gamma/beta: constant, single-buffered.
                    pl.BlockSpec((3, m_pad), lambda i: (0, 0),
                                 pipeline_mode=pl.Buffered(1)),
                ],
                out_specs=pl.BlockSpec((tile_rows, m_pad), lambda i: (i, 0)),
            ),
            compiler_params=pltpu.CompilerParams(
                dimension_semantics=("parallel",),
                vmem_limit_bytes=vmem_limit),
            cost_estimate=cost,
        )(x2, w_p, params)
    else:
        num_k = k_pad // tile_k
        out = pl.pallas_call(
            functools.partial(_ktiled_kernel, eps=eps, valid_cols=out_dim,
                              mm_dtype=mm_dtype),
            out_shape=jax.ShapeDtypeStruct((n_rows_p, m_pad), out_dtype),
            grid_spec=pltpu.PrefetchScalarGridSpec(
                num_scalar_prefetch=0,
                grid=(num_row_tiles, num_k),
                in_specs=[
                    pl.BlockSpec((tile_rows, tile_k), lambda i, k: (i, k)),
                    pl.BlockSpec((tile_k, m_pad), lambda i, k: (k, 0)),
                    pl.BlockSpec((3, m_pad), lambda i, k: (0, 0),
                                 pipeline_mode=pl.Buffered(1)),
                ],
                out_specs=pl.BlockSpec((tile_rows, m_pad), lambda i, k: (i, 0)),
                scratch_shapes=[pltpu.VMEM((tile_rows, m_pad), jnp.float32)],
            ),
            compiler_params=pltpu.CompilerParams(
                dimension_semantics=("parallel", "arbitrary"),
                vmem_limit_bytes=vmem_limit),
            cost_estimate=cost,
        )(x2, w_p, params)

    return out[:n_rows, :out_dim].reshape(*lead, out_dim)


def shared_mlp(x, w, b, gamma, beta, *, eps=1e-5, tile_rows=512, use_bf16=True,
               out_dtype=None):
    """One-shot convenience wrapper.  For repeated calls with the same weights,
    call prepare_shared_mlp_params once and shared_mlp_apply per batch."""
    prep = prepare_shared_mlp_params(w, b, gamma, beta, use_bf16=use_bf16)
    return shared_mlp_apply(x, prep, eps=eps, tile_rows=tile_rows,
                            out_dtype=out_dtype)


def _reference(x, w, b, gamma, beta, eps=1e-5):
    y = jnp.einsum("...i,io->...o", x, w) + b
    mean = jnp.mean(y, axis=-1, keepdims=True)
    var = jnp.mean((y - mean) ** 2, axis=-1, keepdims=True)
    yn = (y - mean) / jnp.sqrt(var + eps) * gamma + beta
    c = 0.7978845608028654
    return 0.5 * yn * (1.0 + jnp.tanh(c * (yn + 0.044715 * yn ** 3)))


if __name__ == "__main__":
    key = jax.random.PRNGKey(0)
    k_x, k_w, k_b, k_x2, k_w2, k_b2 = jax.random.split(key, 6)

    # --- Test 1: small SharedMlp, fused (weight-resident) path -------------
    batch, seq, in_dim, out_dim = 2, 8, 32, 32
    x = jax.random.normal(k_x, (batch, seq, in_dim), dtype=jnp.float32)
    bound = 1.0 / jnp.sqrt(in_dim)
    w = jax.random.uniform(k_w, (in_dim, out_dim), jnp.float32, -bound, bound)
    b = jax.random.uniform(k_b, (out_dim,), jnp.float32, -bound, bound)
    gamma = jnp.ones((out_dim,), jnp.float32)
    beta = jnp.zeros((out_dim,), jnp.float32)

    ref = _reference(x, w, b, gamma, beta)

    out = jax.block_until_ready(shared_mlp(x, w, b, gamma, beta))
    assert out.shape == (batch, seq, out_dim)
    # bf16 matmul inputs with f32 accumulation -> loosened tolerance.
    assert jnp.allclose(out, ref, atol=2e-2, rtol=2e-2), "bf16 mismatch vs reference"

    out_f32 = jax.block_until_ready(shared_mlp(x, w, b, gamma, beta, use_bf16=False))
    assert jnp.allclose(out_f32, ref, atol=2e-5, rtol=2e-5), "f32 mismatch vs reference"

    # --- Test 2: K-tiled (streamed-weight, accumulator) path ---------------
    in2, out2 = 256, 128
    x2 = jax.random.normal(k_x2, (batch, seq, in2), dtype=jnp.float32)
    bound2 = 1.0 / jnp.sqrt(in2)
    w2 = jax.random.uniform(k_w2, (in2, out2), jnp.float32, -bound2, bound2)
    b2 = jax.random.uniform(k_b2, (out2,), jnp.float32, -bound2, bound2)
    g2 = jnp.ones((out2,), jnp.float32)
    be2 = jnp.zeros((out2,), jnp.float32)
    ref2 = _reference(x2, w2, b2, g2, be2)

    prep2 = prepare_shared_mlp_params(w2, b2, g2, be2, use_bf16=True,
                                      tile_k=128, force_ktiled=True)
    out2_k = jax.block_until_ready(shared_mlp_apply(x2, prep2))
    assert out2_k.shape == (batch, seq, out2)
    assert jnp.allclose(out2_k, ref2, atol=3e-2, rtol=3e-2), "K-tiled mismatch vs reference"

    print("KERNEL_OK")
</pallas_src>

<mosaic_0001>
module attributes {stable_mosaic.version = 11 : i64} {
  func.func @_fused_kernel(%arg0: i32, %arg1: memref<8x32xf32, #tpu.memory_space<vmem>>, %arg2: memref<32x128xbf16, #tpu.memory_space<vmem>>, %arg3: memref<3x128xf32, #tpu.memory_space<vmem>>, %arg4: memref<8x128xf32, #tpu.memory_space<vmem>>) attributes {dimension_semantics = [#tpu.dimension_semantics<parallel>], iteration_bounds = array<i64: 2>, scalar_prefetch = 0 : i64, scratch_operands = 0 : i64, tpu.core_type = #tpu.core_type<tc>, window_params = [{transform_indices = @transform_0, window_bounds = array<i64: 8, 32>}, {pipeline_mode = #tpu.pipeline_mode<synchronous>, transform_indices = @transform_1, window_bounds = array<i64: 32, 128>}, {pipeline_mode = #tpu.pipeline_mode<synchronous>, transform_indices = @transform_2, window_bounds = array<i64: 3, 128>}, {transform_indices = @transform_3, window_bounds = array<i64: 8, 128>}]} {
    %c0 = arith.constant 0 : index
    %c0_0 = arith.constant 0 : index
    %0 = vector.load %arg1[%c0, %c0_0] : memref<8x32xf32, #tpu.memory_space<vmem>>, vector<8x32xf32>
    %1 = arith.truncf %0 : vector<8x32xf32> to vector<8x32xbf16>
    %c0_1 = arith.constant 0 : index
    %c0_2 = arith.constant 0 : index
    %2 = vector.load %arg2[%c0_1, %c0_2] : memref<32x128xbf16, #tpu.memory_space<vmem>>, vector<32x128xbf16>
    %cst = arith.constant dense<0.000000e+00> : vector<8x128xf32>
    %3 = tpu.matmul %1, %2, %cst {dimension_numbers = #tpu.dot_dimension_numbers<[1], [0], [0], [1], [0, 0, 1, 1], [], []>} : vector<8x32xbf16>, vector<32x128xbf16>, vector<8x128xf32> -> vector<8x128xf32>
    %c0_3 = arith.constant 0 : index
    %c0_4 = arith.constant 0 : index
    %4 = vector.load %arg3[%c0_3, %c0_4] : memref<3x128xf32, #tpu.memory_space<vmem>>, vector<3x128xf32>
    %5 = vector.extract_strided_slice %4 {offsets = [0, 0], sizes = [1, 128], strides = [1, 1]} : vector<3x128xf32> to vector<1x128xf32>
    %6 = vector.broadcast %5 : vector<1x128xf32> to vector<8x128xf32>
    %7 = arith.addf %3, %6 : vector<8x128xf32>
    %8 = vector.extract_strided_slice %4 {offsets = [1, 0], sizes = [1, 128], strides = [1, 1]} : vector<3x128xf32> to vector<1x128xf32>
    %9 = vector.extract_strided_slice %4 {offsets = [2, 0], sizes = [1, 128], strides = [1, 1]} : vector<3x128xf32> to vector<1x128xf32>
    %cst_5 = arith.constant dense<0.000000e+00> : vector<8xf32>
    %10 = vector.multi_reduction <add>, %7, %cst_5 [1] : vector<8x128xf32> to vector<8xf32>
    %11 = vector.shape_cast %10 : vector<8xf32> to vector<8x1xf32>
    %12 = arith.mulf %7, %7 : vector<8x128xf32>
    %cst_6 = arith.constant dense<0.000000e+00> : vector<8xf32>
    %13 = vector.multi_reduction <add>, %12, %cst_6 [1] : vector<8x128xf32> to vector<8xf32>
    %14 = vector.shape_cast %13 : vector<8xf32> to vector<8x1xf32>
    %cst_7 = arith.constant 3.125000e-02 : f32
    %15 = vector.broadcast %cst_7 : f32 to vector<8x1xf32>
    %16 = arith.mulf %11, %15 : vector<8x1xf32>
    %cst_8 = arith.constant 3.125000e-02 : f32
    %17 = vector.broadcast %cst_8 : f32 to vector<8x1xf32>
    %18 = arith.mulf %14, %17 : vector<8x1xf32>
    %19 = arith.mulf %16, %16 : vector<8x1xf32>
    %20 = arith.subf %18, %19 : vector<8x1xf32>
    %cst_9 = arith.constant 0.000000e+00 : f32
    %21 = vector.broadcast %cst_9 : f32 to vector<8x1xf32>
    %22 = arith.maximumf %20, %21 : vector<8x1xf32>
    %cst_10 = arith.constant 9.99999974E-6 : f32
    %23 = vector.broadcast %cst_10 : f32 to vector<8x1xf32>
    %24 = arith.addf %22, %23 : vector<8x1xf32>
    %25 = math.rsqrt %24 : vector<8x1xf32>
    %26 = vector.broadcast %16 : vector<8x1xf32> to vector<8x128xf32>
    %27 = arith.subf %7, %26 : vector<8x128xf32>
    %28 = vector.broadcast %25 : vector<8x1xf32> to vector<8x128xf32>
    %29 = arith.mulf %27, %28 : vector<8x128xf32>
    %30 = vector.broadcast %8 : vector<1x128xf32> to vector<8x128xf32>
    %31 = arith.mulf %29, %30 : vector<8x128xf32>
    %32 = vector.broadcast %9 : vector<1x128xf32> to vector<8x128xf32>
    %33 = arith.addf %31, %32 : vector<8x128xf32>
    %cst_11 = arith.constant 4.471500e-02 : f32
    %34 = vector.broadcast %cst_11 : f32 to vector<8x128xf32>
    %35 = arith.mulf %34, %33 : vector<8x128xf32>
    %36 = arith.mulf %35, %33 : vector<8x128xf32>
    %37 = arith.mulf %36, %33 : vector<8x128xf32>
    %38 = arith.addf %33, %37 : vector<8x128xf32>
    %cst_12 = arith.constant 0.797884583 : f32
    %39 = vector.broadcast %cst_12 : f32 to vector<8x128xf32>
    %40 = arith.mulf %39, %38 : vector<8x128xf32>
    %cst_13 = arith.constant 5.000000e-01 : f32
    %41 = vector.broadcast %cst_13 : f32 to vector<8x128xf32>
    %42 = arith.mulf %41, %33 : vector<8x128xf32>
    %43 = math.tanh %40 : vector<8x128xf32>
    %cst_14 = arith.constant 1.000000e+00 : f32
    %44 = vector.broadcast %cst_14 : f32 to vector<8x128xf32>
    %45 = arith.addf %44, %43 : vector<8x128xf32>
    %46 = arith.mulf %42, %45 : vector<8x128xf32>
    %c0_15 = arith.constant 0 : index
    %c0_16 = arith.constant 0 : index
    %47 = vector.load %arg4[%c0_15, %c0_16] : memref<8x128xf32, #tpu.memory_space<vmem>>, vector<8x128xf32>
    tpu.vector_store %arg4[%c0_15, %c0_16], %46 {strides = array<i32>} : memref<8x128xf32, #tpu.memory_space<vmem>>, vector<8x128xf32>,
    return
  }
  func.func @transform_0(%arg0: i32) -> (i32, i32) {
    %c0_i32 = arith.constant 0 : i32
    %c0_i32_0 = arith.constant 0 : i32
    return %arg0, %c0_i32 : i32, i32
  }
  func.func @transform_1(%arg0: i32) -> (i32, i32) {
    %c0_i32 = arith.constant 0 : i32
    %c0_i32_0 = arith.constant 0 : i32
    %c0_i32_1 = arith.constant 0 : i32
    return %c0_i32, %c0_i32_0 : i32, i32
  }
  func.func @transform_2(%arg0: i32) -> (i32, i32) {
    %c0_i32 = arith.constant 0 : i32
    %c0_i32_0 = arith.constant 0 : i32
    %c0_i32_1 = arith.constant 0 : i32
    return %c0_i32, %c0_i32_0 : i32, i32
  }
  func.func @transform_3(%arg0: i32) -> (i32, i32) {
    %c0_i32 = arith.constant 0 : i32
    %c0_i32_0 = arith.constant 0 : i32
    return %arg0, %c0_i32 : i32, i32
  }
}

</mosaic_0001>

<llo_original>
// kernel: tpu_custom_call.1
$region0: #{tpu_custom_call.1}
  #allocation0 [shape = 'u32[]', space=smem, size = 0x4, offset = 0x4, fixed_abs, tag = 'smem constant byte address 0x4 - core index']
  #allocation1 [shape = 'u32[144,128]{1,0:T(1,128)}', space=vmem, size = 0x12000, scoped, tag = 'internal scratch']
  %s0 = inlined_call_operand.hbm [shape: f32[16,32], index: 0, kind: input, shape index: {}]
  %s1 = inlined_call_operand.hbm [shape: bf16[32,128], index: 1, kind: input, shape index: {}]
  %s2 = inlined_call_operand.vmem [shape: f32[3,128], index: 2, kind: input, shape index: {}]
  %s3 = inlined_call_operand.hbm [shape: f32[16,128], index: 3, kind: output, shape index: {}]
  %s4 = sld [smem:[#allocation0]]
  $region53: #{tpu_custom_call.1} parent=0
    _
  %s6 = ssub.s32 1, %s4
  %s7 = scalar_select 0, %s6, %s4
  $region1: #{tpu_custom_call.1} parent=0
    #allocation2 [shape = 'u8[8192]{0}', space=vmem, size = 0x2000, scoped, tag = 'input window, operand 0']
    #allocation3 [shape = 's32[2]{0}', space=sflag, size = 0x8, scoped, tag = 'scoped memory for tpu_custom_call.1']
    #allocation4 [shape = 's32[2]{0}', space=sflag, size = 0x8, scoped, tag = 'scoped memory for tpu_custom_call.1']
    #allocation5 [shape = 'u8[8192]{0}', space=vmem, size = 0x2000, scoped, tag = 'input window, operand 1, single buffered']
    #allocation6 [shape = 's32[1]{0}', space=sflag, size = 0x4, scoped, tag = 'scoped memory for tpu_custom_call.1']
    #allocation7 [shape = 'u8[8192]{0}', space=vmem, size = 0x2000, scoped, tag = 'output window, operand 0']
    %8 = vsyncpa [#allocation3], 0
    %s9 = scalar_lea.sflag [#allocation3], 1
    %10 = vsyncpa %s9, 0
    %11 = vsyncpa [#allocation6], 0
    %12 = vsyncpa [#allocation4], 0
    %s13 = scalar_lea.sflag [#allocation4], 1
    %14 = vsyncpa %s13, 0
    loop: start=0, step=1, limit=4
    $region2: #{tpu_custom_call.1} parent=1 // loop_pre_header
      _
    $region3: #{tpu_custom_call.1} parent=1 // loop_header
      %s16 = sphi 0, %s20
      %p17 = scmp.ge.s32.totalorder %s16, 4
      %s26 = sphi 0, %s28
      %s29 = sphi 0, %s26
      %s30 = sphi 0, %s29
      %s46 = sphi 0, %s30
      %s50 = sphi 0, %s50
      %s52 = sphi 0, %s50
      %s53 = sphi 0, %s52
      %s67 = sphi 0, %s53
      %s71 = sphi 0, %s71
      %s73 = sphi 0, %s71
      %s74 = sphi 0, %s73
      %s88 = sphi 0, %s74
      %s94 = sphi 0, %s96
      %s97 = sphi 0, %s94
      %s98 = sphi 0, %s97
      %s114 = sphi 0, %s98
    $region4: #{tpu_custom_call.1} parent=1 // loop_header_branch
      %19 = sbr.rel (%p17) target = $region8
    $region5: #{tpu_custom_call.1} parent=1 // loop_body
      %s21 = ssub.s32 %s16, 1
      %s22 = ssub.s32 %s16, 2
      %s23 = sadd.s32 %s16, 1
      %s24 = ssub.s32 %s16, %s23
      %p25 = scmp.eq.s32.totalorder %s24, 0
      %s27 = sadd.s32 %s26, 1
      %s28 = scalar_select %p25, %s26, %s27
      %p31 = pneg %p25
      %p32 = scmp.eq.s32.totalorder %s16, 1
      %p33 = por %p31, %p32
      %p34 = scmp.ne.s32.totalorder %s26, %s29
      %p35 = scmp.eq.s32.totalorder %s16, 0
      %p36 = por %p34, %p35
      %p37 = scmp.ne.s32.totalorder %s26, %s29
      %p38 = scmp.eq.s32.totalorder %s21, 1
      %p39 = por %p37, %p38
      %p40 = scmp.ne.s32.totalorder %s29, %s30
      %p41 = scmp.eq.s32.totalorder %s21, 0
      %p42 = por %p40, %p41
      %p43 = scmp.ne.s32.totalorder %s29, %s30
      %p44 = scmp.eq.s32.totalorder %s22, 1
      %p45 = por %p43, %p44
      %p47 = scmp.ne.s32.totalorder %s30, %s46
      %p48 = scmp.eq.s32.totalorder %s22, 0
      %p49 = por %p47, %p48
      %s51 = sadd.s32 %s50, 1
      %p54 = scmp.eq.s32.totalorder %s16, 1
      %p55 = scmp.ne.s32.totalorder %s50, %s52
      %p56 = scmp.eq.s32.totalorder %s16, 0
      %p57 = por %p55, %p56
      %p58 = scmp.ne.s32.totalorder %s50, %s52
      %p59 = scmp.eq.s32.totalorder %s21, 1
      %p60 = por %p58, %p59
      %p61 = scmp.ne.s32.totalorder %s52, %s53
      %p62 = scmp.eq.s32.totalorder %s21, 0
      %p63 = por %p61, %p62
      %p64 = scmp.ne.s32.totalorder %s52, %s53
      %p65 = scmp.eq.s32.totalorder %s22, 1
      %p66 = por %p64, %p65
      %p68 = scmp.ne.s32.totalorder %s53, %s67
      %p69 = scmp.eq.s32.totalorder %s22, 0
      %p70 = por %p68, %p69
      %s72 = sadd.s32 %s71, 1
      %p75 = scmp.eq.s32.totalorder %s16, 1
      %p76 = scmp.ne.s32.totalorder %s71, %s73
      %p77 = scmp.eq.s32.totalorder %s16, 0
      %p78 = por %p76, %p77
      %p79 = scmp.ne.s32.totalorder %s71, %s73
      %p80 = scmp.eq.s32.totalorder %s21, 1
      %p81 = por %p79, %p80
      %p82 = scmp.ne.s32.totalorder %s73, %s74
      %p83 = scmp.eq.s32.totalorder %s21, 0
      %p84 = por %p82, %p83
      %p85 = scmp.ne.s32.totalorder %s73, %s74
      %p86 = scmp.eq.s32.totalorder %s22, 1
      %p87 = por %p85, %p86
      %p89 = scmp.ne.s32.totalorder %s74, %s88
      %p90 = scmp.eq.s32.totalorder %s22, 0
      %p91 = por %p89, %p90
      %s92 = ssub.s32 %s16, %s23
      %p93 = scmp.eq.s32.totalorder %s92, 0
      %s95 = sadd.s32 %s94, 1
      %s96 = scalar_select %p93, %s94, %s95
      %p99 = pneg %p93
      %p100 = scmp.eq.s32.totalorder %s16, 1
      %p101 = por %p99, %p100
      %p102 = scmp.ne.s32.totalorder %s94, %s97
      %p103 = scmp.eq.s32.totalorder %s16, 0
      %p104 = por %p102, %p103
      %p105 = scmp.ne.s32.totalorder %s94, %s97
      %p106 = scmp.eq.s32.totalorder %s21, 1
      %p107 = por %p105, %p106
      %p108 = scmp.ne.s32.totalorder %s97, %s98
      %p109 = scmp.eq.s32.totalorder %s21, 0
      %p110 = por %p108, %p109
      %p111 = scmp.ne.s32.totalorder %s97, %s98
      %p112 = scmp.eq.s32.totalorder %s22, 1
      %p113 = por %p111, %p112
      %p115 = scmp.ne.s32.totalorder %s98, %s114
      %p116 = scmp.eq.s32.totalorder %s22, 0
      %p117 = por %p115, %p116
      %p118 = scmp.le.s32.totalorder 1, %s16
      %p119 = scmp.lt.s32.totalorder %s16, 3
      %p120 = pnand %p118, %p119
      %p121 = pneg %p120
      // Predicated region
      $region9: #{tpu_custom_call.1} parent=5 // pred_check
        _
      $region10: #{tpu_custom_call.1} parent=5 // pred_check_branch
        %123 = sbr.rel (%p120) target = $region12
      $region11: #{tpu_custom_call.1} parent=5 // pred_region
        %s124 = ssub.s32 %s16, 1
        // Predicated region
        $region13: #{tpu_custom_call.1} parent=11 // pred_check
          %p125 = pneg %p63
        $region14: #{tpu_custom_call.1} parent=11 // pred_check_branch
          %127 = sbr.rel (%p125) target = $region16
        $region15: #{tpu_custom_call.1} parent=11 // pred_region
          %s129 = ssub.s32 256, 256
          %130 = vsyncadd [#allocation6], %s129
          %s131 = sshll.u32 [#allocation5], 4
          %s132 = int_to_ptr.vmem [resolvable:$true] %s131
          %137 = dma.hbm_to_vmem [thread:$0]  %s1, 256, %s132, [#allocation6], 64, 64, 4
        $region16: #{tpu_custom_call.1} parent=11 // pred_fallthru
          _
        // Predicated region
        $region17: #{tpu_custom_call.1} parent=11 // pred_check
          %p138 = pneg %p84
        $region18: #{tpu_custom_call.1} parent=11 // pred_check_branch
          %140 = sbr.rel (%p138) target = $region20
        $region19: #{tpu_custom_call.1} parent=11 // pred_region
          _
        $region20: #{tpu_custom_call.1} parent=11 // pred_fallthru
          _
      $region12: #{tpu_custom_call.1} parent=5 // pred_fallthru
        _
      %p141 = scmp.lt.s32.totalorder %s16, 2
      // Predicated region
      $region21: #{tpu_custom_call.1} parent=5 // pred_check
        %p142 = pneg %p141
      $region22: #{tpu_custom_call.1} parent=5 // pred_check_branch
        %144 = sbr.rel (%p142) target = $region24
      $region23: #{tpu_custom_call.1} parent=5 // pred_region
        // Predicated region
        $region25: #{tpu_custom_call.1} parent=23 // pred_check
          %p145 = pneg %p36
        $region26: #{tpu_custom_call.1} parent=23 // pred_check_branch
          %147 = sbr.rel (%p145) target = $region28
        $region27: #{tpu_custom_call.1} parent=23 // pred_region
          %s148 = sand.u32 %s26, 1
          %s149 = scalar_lea.sflag [#allocation3], %s148
          %s150 = sand.u32 %s26, 1
          %s151 = smul.addr %s150, 8
          %s152 = scalar_lea.vmem [#allocation2], %s151
          %s154 = ssub.s32 128, 128
          %155 = vsyncadd %s149, %s154
          %s156 = smul.addr %s16, 128
          %s157 = scalar_lea.hbm %s0, %s156
          %s159 = sshll.u32 %s152, 4
          %s160 = int_to_ptr.vmem [resolvable:$true] %s159
          %162 = dma.hbm_to_vmem [thread:$0]  %s157, 128, %s160, %s149
        $region28: #{tpu_custom_call.1} parent=23 // pred_fallthru
          _
      $region24: #{tpu_custom_call.1} parent=5 // pred_fallthru
        _
      %p163 = scmp.le.s32.totalorder 1, %s16
      %p164 = scmp.lt.s32.totalorder %s16, 3
      %p165 = pnand %p163, %p164
      %p166 = pneg %p165
      // Predicated region
      $region29: #{tpu_custom_call.1} parent=5 // pred_check
        _
      $region30: #{tpu_custom_call.1} parent=5 // pred_check_branch
        %168 = sbr.rel (%p165) target = $region32
      $region31: #{tpu_custom_call.1} parent=5 // pred_region
        %s169 = ssub.s32 %s16, 1
        %s170 = sand.u32 %s29, 1
        %s171 = scalar_lea.sflag [#allocation3], %s170
        %s172 = sand.u32 %s29, 1
        %s173 = smul.addr %s172, 8
        %s174 = scalar_lea.vmem [#allocation2], %s173
        // Predicated region
        $region33: #{tpu_custom_call.1} parent=31 // pred_check
          %p175 = pneg %p42
        $region34: #{tpu_custom_call.1} parent=31 // pred_check_branch
          %177 = sbr.rel (%p175) target = $region36
        $region35: #{tpu_custom_call.1} parent=31 // pred_region
          %178 = dma.done %s171, 128
        $region36: #{tpu_custom_call.1} parent=31 // pred_fallthru
          _
        // Predicated region
        $region37: #{tpu_custom_call.1} parent=31 // pred_check
          %p179 = pneg %p63
        $region38: #{tpu_custom_call.1} parent=31 // pred_check_branch
          %181 = sbr.rel (%p179) target = $region40
        $region39: #{tpu_custom_call.1} parent=31 // pred_region
          %182 = dma.done [#allocation6], 256
        $region40: #{tpu_custom_call.1} parent=31 // pred_fallthru
          _
        %s183 = sand.u32 %s29, 1
        %s184 = scalar_lea.sflag [#allocation3], %s183
        %s185 = sand.u32 %s29, 1
        %s186 = smul.addr %s185, 8
        %s187 = scalar_lea.vmem [#allocation2], %s186
        %p188 = pneg %p42
        %p189 = pneg %p39
        %p190 = pneg %p63
        %p191 = pneg %p60
        %p192 = pneg %p84
        %p193 = pneg %p81
        %p194 = pneg %p110
        %p195 = pneg %p107
        %s196 = sand.u32 %s97, 1
        %s197 = scalar_lea.sflag [#allocation4], %s196
        %s198 = sand.u32 %s97, 1
        %s199 = smul.addr %s198, 8
        %s200 = scalar_lea.vmem [#allocation7], %s199
        %v202 = vld [vmem:[%s174] sm:$0xff]
        %v203 = vpack.c.bf16 %v202, %v202
        %v204 = vld [vmem:[#allocation5] sm:$0xf]
        %v205 = vld [vmem:[#allocation5 + $0x4] sm:$0xf]
        %v206 = vld [vmem:[#allocation5 + $0x8] sm:$0xf]
        %v207 = vld [vmem:[#allocation5 + $0xc] sm:$0xf]
        %v208 = vld [vmem:[%s2] sm:$0x7]
        %v209 = vlaneseq
        %v210 = vshrl.u32 %v209, 7
        %v211 = vsub.s32 0, %v210
        %v212 = vrot.slane %v208, %v211
        %v217 = vunpack.c.l.b16 %v204
        %v218 = vunpack.c.l.b16 %v205
        %v219 = vunpack.c.l.b16 %v206
        %v220 = vunpack.c.l.b16 %v207
        %v221 = vpack.c.b16 %v218, %v217
        %v222 = vpack.c.b16 %v220, %v219
        %vm225 = vcmask 261120
        %v227 = vsel %vm225, %v203, 0
        %229 = vmatprep.subr.bf16.mxu0 0
        %230 = vmatpush1.bf16.msra.mxu0 %v221
        %231 = vmatprep.subr.bf16.mxu0 0
        %232 = vmatpush1.bf16.msra.mxu0 %v222
        %233 = vmatprep.subr.bf16.mxu0 0
        %234 = vmatpush1.bf16.msra.mxu0 0
        %235 = vmatprep.subr.bf16.mxu0 0
        %236 = vmatpush1.bf16.msra.mxu0 0
        %237 = vmatprep.subr.bf16.mxu0 0
        %238 = vmatpush1.bf16.msra.mxu0 0
        %239 = vmatprep.subr.bf16.mxu0 0
        %240 = vmatpush1.bf16.msra.mxu0 0
        %241 = vmatprep.subr.bf16.mxu0 0
        %242 = vmatpush1.bf16.msra.mxu0 0
        %243 = vmatprep.subr.bf16.mxu0 0
        %244 = vmatpush1.bf16.msra.mxu0 0
        %245 = vmatprep.subr.bf16.mxu0 0
        %246 = vmatpush1.bf16.msra.mxu0 0
        %247 = vmatprep.subr.bf16.mxu0 0
        %248 = vmatpush1.bf16.msra.mxu0 0
        %249 = vmatprep.subr.bf16.mxu0 0
        %250 = vmatpush1.bf16.msra.mxu0 0
        %251 = vmatprep.subr.bf16.mxu0 0
        %252 = vmatpush1.bf16.msra.mxu0 0
        %253 = vmatprep.subr.bf16.mxu0 0
        %254 = vmatpush1.bf16.msra.mxu0 0
        %255 = vmatprep.subr.bf16.mxu0 0
        %256 = vmatpush1.bf16.msra.mxu0 0
        %257 = vmatprep.subr.bf16.mxu0 0
        %258 = vmatpush1.bf16.msra.mxu0 0
        %259 = vmatprep.subr.bf16.mxu0 0
        %260 = vmatpush1.bf16.msra.mxu0 0
        %261 = vmatprep.mubr.bf16.mxu0 0
        %262 = vmatmul.mubr.bf16.gmra.mrb[0].mxu0 %v227
        %v263 = vpop.f32.mrb[0].mxu0
        %v264 = vadd.f32 %v212, %v263
        %v265 = vpop.f32.mrb[0].mxu0
        %v266 = vpop.f32.mrb[0].mxu0
        %v267 = vpop.f32.mrb[0].mxu0
        %268 = vdwg.mxu0
        %269 = vadd.xlane.f32.xlu0 %v264
        %v270 = vpop.xlane.xlu0 %269
        %v271 = vmul.f32 %v264, %v264
        %272 = vadd.xlane.f32.xlu0 %v271
        %v273 = vpop.xlane.xlu0 %272
        %v274 = vmul.f32 %v270, 0.03125
        %v275 = vmul.f32 %v273, 0.03125
        %v276 = vmul.f32 %v274, %v274
        %v277 = vsub.f32 %v275, %v276
        %v278 = vmax.f32 %v277, 0.0
        %v279 = vadd.f32 %v278, 1e-05
        %v280 = vrsqrt.pop %v279
        %v281 = vsub.f32 %v264, %v274
        %v282 = vmul.f32 %v281, %v280
        %v283 = vlaneseq
        %v284 = vshrl.u32 %v283, 7
        %v285 = vsub.s32 1, %v284
        %v286 = vrot.slane %v208, %v285
        %v287 = vmul.f32 %v282, %v286
        %v288 = vlaneseq
        %v289 = vshrl.u32 %v288, 7
        %v290 = vsub.s32 2, %v289
        %v291 = vrot.slane %v208, %v290
        %v292 = vadd.f32 %v287, %v291
        %v293 = vmul.f32 %v292, 0.044715
        %v294 = vmul.f32 %v293, %v292
        %v295 = vmul.f32 %v294, %v292
        %v296 = vadd.f32 %v292, %v295
        %v297 = vmul.f32 %v296, 0.7978846
        %v298 = vmul.f32 %v292, 0.5
        %v299 = vtanh.pop %v297
        %v300 = vadd.f32 %v299, 1.0
        %v301 = vmul.f32 %v298, %v300
        %302 = vst [vmem:[%s200] sm:$0xff] %v301
        %s303 = sand.u32 %s97, 1
        %s304 = scalar_lea.sflag [#allocation4], %s303
        %s305 = sand.u32 %s97, 1
        %s306 = smul.addr %s305, 8
        %s307 = scalar_lea.vmem [#allocation7], %s306
        // Predicated region
        $region41: #{tpu_custom_call.1} parent=31 // pred_check
          %p308 = pneg %p107
        $region42: #{tpu_custom_call.1} parent=31 // pred_check_branch
          %310 = sbr.rel (%p308) target = $region44
        $region43: #{tpu_custom_call.1} parent=31 // pred_region
          %s312 = ssub.s32 128, 128
          %313 = vsyncadd %s304, %s312
          %s314 = smul.addr %s21, 128
          %s315 = scalar_lea.hbm %s3, %s314
          %s317 = sshll.u32 %s307, 4
          %s318 = int_to_ptr.vmem [resolvable:$true] %s317
          %320 = dma.vmem_to_hbm [thread:$0]  %s318, 128, %s315, %s304
        $region44: #{tpu_custom_call.1} parent=31 // pred_fallthru
          _
      $region32: #{tpu_custom_call.1} parent=5 // pred_fallthru
        _
      %p321 = scmp.le.s32.totalorder 2, %s16
      // Predicated region
      $region45: #{tpu_custom_call.1} parent=5 // pred_check
        %p322 = pneg %p321
      $region46: #{tpu_custom_call.1} parent=5 // pred_check_branch
        %324 = sbr.rel (%p322) target = $region48
      $region47: #{tpu_custom_call.1} parent=5 // pred_region
        %s325 = ssub.s32 %s16, 2
        // Predicated region
        $region49: #{tpu_custom_call.1} parent=47 // pred_check
          %p326 = pneg %p113
        $region50: #{tpu_custom_call.1} parent=47 // pred_check_branch
          %328 = sbr.rel (%p326) target = $region52
        $region51: #{tpu_custom_call.1} parent=47 // pred_region
          %s329 = sand.u32 %s98, 1
          %s330 = scalar_lea.sflag [#allocation4], %s329
          %s331 = sand.u32 %s98, 1
          %s332 = smul.addr %s331, 8
          %s333 = scalar_lea.vmem [#allocation7], %s332
          %334 = dma.done %s330, 128
        $region52: #{tpu_custom_call.1} parent=47 // pred_fallthru
          _
      $region48: #{tpu_custom_call.1} parent=5 // pred_fallthru
        _
    $region6: #{tpu_custom_call.1} parent=1 // loop_footer
      %s20 = sadd.s32 1, %s16
    $region7: #{tpu_custom_call.1} parent=1 // loop_footer_branch
      %15 = sbr.rel target = $region3
    $region8: #{tpu_custom_call.1} parent=1 // loop_exit
      _
    %335 = vsyncpa [#allocation3], 1
    %s336 = scalar_lea.sflag [#allocation3], 1
    %337 = vsyncpa %s336, 1
    %338 = vsyncpa [#allocation6], 1
    %339 = vsyncpa [#allocation4], 1
    %s340 = scalar_lea.sflag [#allocation4], 1
    %341 = vsyncpa %s340, 1

</llo_original>
